<compile_context>
chip_gen: v7x
topology: tpu7x:2x2x1
jax: 0.10.0
libtpu: 0.0.40
codegen_flags: <defaults>
</compile_context>

<pallas_src>
import numpy as np

import jax
import jax.numpy as jnp
from jax.experimental import pallas as pl
from jax.experimental.pallas import tpu as pltpu


# ----------------------------- host-side helpers -----------------------------

def _gaussian_1d(ksize: int, sigma: float) -> np.ndarray:
    """1-D Gaussian taps, normalized to sum 1."""
    x = np.arange(ksize, dtype=np.float64)
    mean = (ksize - 1) / 2.0
    g = np.exp(-0.5 * ((x - mean) / sigma) ** 2)
    return (g / g.sum()).astype(np.float32)


def _blur_matrix(in_size: int, out_size: int, g: np.ndarray,
                 stride: int, pad: int) -> np.ndarray:
    """Banded matrix M (out, in): out[i] = sum_p g[p] * x_zeropad[i*stride + p]."""
    K = g.shape[0]
    M = np.zeros((out_size, in_size), dtype=np.float32)
    for i in range(out_size):
        for p in range(K):
            src = i * stride + p - pad
            if 0 <= src < in_size:
                M[i, src] += g[p]
    return M


def _choose_plane_block(nc: int, h: int, w: int, ho: int, wo: int,
                        out_itemsize: int) -> tuple[int, int, int]:
    """Pick (cblk, nblocks, nc_pad) under a conservative VMEM budget."""
    budget = 8 << 20                      # well under v5e 16 MiB scoped default
    ab_bytes = 2 * 2 * (ho * h + w * wo)  # A + B, bf16, double-buffered
    per_plane = (2 * h * w * 2            # input slab, bf16, double-buffered
                 + 2 * ho * wo * out_itemsize   # output slab, double-buffered
                 + (h * wo + ho * wo) * 4)      # f32 intermediates
    cap = max(1, min(32, (budget - ab_bytes) // max(per_plane, 1)))
    if nc >= 2:
        nblocks = max(2, -(-nc // cap))   # >= 2 blocks -> even split on v7x's 2 TCs
    else:
        nblocks = 1
    cblk = -(-nc // nblocks)
    # multi-block input slab is (cblk*H, W): keep its sublane dim tile-aligned
    if nblocks > 1 and (cblk * h) % 16 != 0:
        nblocks, cblk = 1, nc
    return cblk, nblocks, nblocks * cblk


# --------------------------------- kernel ------------------------------------

def _blur_downsample_kernel(a_ref, b_ref, x_ref, o_ref):
    # a_ref: (Ho, H)      bf16  row-pass blur/stride matrix (shared)
    # b_ref: (W, Wo)      bf16  col-pass blur/stride matrix (shared)
    # x_ref: (Cblk*H, W)  bf16  Cblk image planes, planes folded into rows
    # o_ref: (Cblk, Ho, Wo)     corresponding output planes
    cblk, ho, wo = o_ref.shape
    h = a_ref.shape[1]

    amat = a_ref[...]
    bmat = b_ref[...]

    # Column pass: one big MXU matmul, M = Cblk*H, bf16 operands, f32 accumulation.
    t_all = jnp.dot(x_ref[...], bmat, preferred_element_type=jnp.float32)  # (Cblk*H, Wo)
    t_all = t_all.astype(bmat.dtype)

    # Row pass: per-plane rank-2 dots (Cblk is small and static).
    for bidx in range(cblk):
        t_b = t_all[bidx * h:(bidx + 1) * h, :]                            # (H, Wo)
        y = jnp.dot(amat, t_b, preferred_element_type=jnp.float32)         # (Ho, Wo)
        o_ref[bidx] = y.astype(o_ref.dtype)


# -------------------------------- wrapper -------------------------------------

def downsample(im: jax.Array, input_size: int, output_size: int) -> jax.Array:
    """Pallas TPU equivalent of Downsample.forward (divisible-size / stride path)."""
    N, C, H, W = im.shape
    assert H == input_size and W == input_size, "im spatial size must be input_size"

    if input_size % output_size != 0:
        # TODO(synk): grid_sample path not implemented.
        raise NotImplementedError("grid_sample path (non-divisible sizes) not implemented")

    stride = input_size // output_size
    sigma = 0.5 * input_size / output_size
    ksize = int(2 * (sigma * 2) + 1 + 0.5)
    pad = ksize // 2

    g = _gaussian_1d(ksize, sigma)
    Ho = (H + 2 * pad - ksize) // stride + 1
    Wo = (W + 2 * pad - ksize) // stride + 1

    # bf16 operands, f32 accumulation on the MXU.
    A = jnp.asarray(_blur_matrix(H, Ho, g, stride, pad), dtype=jnp.bfloat16)    # (Ho, H)
    B = jnp.asarray(_blur_matrix(W, Wo, g, stride, pad).T, dtype=jnp.bfloat16)  # (W, Wo)

    nc = N * C
    out_itemsize = jnp.dtype(im.dtype).itemsize
    cblk, nblocks, nc_pad = _choose_plane_block(nc, H, W, Ho, Wo, out_itemsize)

    # Fuse N and C, cast once, pad the plane axis to a multiple of cblk, and fold
    # planes into rows so the kernel's column pass is a single big-M matmul.
    x = im.astype(jnp.bfloat16).reshape(nc, H, W)
    if nc_pad != nc:
        x = jnp.pad(x, ((0, nc_pad - nc), (0, 0), (0, 0)))
    x = x.reshape(nc_pad * H, W)

    flops = 2 * nc_pad * (H * W * Wo + Ho * H * Wo)
    bytes_accessed = (nc_pad * H * W * 2 + nc_pad * Ho * Wo * out_itemsize
                      + Ho * H * 2 + W * Wo * 2)

    out = pl.pallas_call(
        _blur_downsample_kernel,
        out_shape=jax.ShapeDtypeStruct((nc_pad, Ho, Wo), im.dtype),
        grid=(nblocks,),
        in_specs=[
            pl.BlockSpec((Ho, H), lambda i: (0, 0)),           # A (shared, resident)
            pl.BlockSpec((W, Wo), lambda i: (0, 0)),           # B (shared, resident)
            pl.BlockSpec((cblk * H, W), lambda i: (i, 0)),     # Cblk planes, folded
        ],
        out_specs=pl.BlockSpec((cblk, Ho, Wo), lambda i: (i, 0, 0)),
        compiler_params=pltpu.CompilerParams(
            dimension_semantics=("parallel",)),
        cost_estimate=pl.CostEstimate(
            flops=flops, transcendentals=0, bytes_accessed=bytes_accessed),
    )(A, B, x)

    return out[:nc].reshape(N, C, Ho, Wo)


# ------------------------------ pure-JAX reference ----------------------------

def downsample_ref(im: jax.Array, input_size: int, output_size: int) -> jax.Array:
    """Reference mirroring the PyTorch module: depthwise Gaussian conv with stride."""
    stride = input_size // output_size
    sigma = 0.5 * input_size / output_size
    ksize = int(2 * (sigma * 2) + 1 + 0.5)
    pad = ksize // 2

    g = _gaussian_1d(ksize, sigma)
    k2 = np.outer(g, g).astype(np.float32)                     # sums to 1
    C = im.shape[1]
    w = jnp.asarray(np.tile(k2[None, None], (C, 1, 1, 1)))     # (C, 1, K, K) depthwise

    return jax.lax.conv_general_dilated(
        im.astype(jnp.float32), w,
        window_strides=(stride, stride),
        padding=((pad, pad), (pad, pad)),
        dimension_numbers=("NCHW", "OIHW", "NCHW"),
        feature_group_count=C,
        precision=jax.lax.Precision.HIGHEST,
    ).astype(im.dtype)


# ----------------------------------- demo --------------------------------------

if __name__ == "__main__":
    key = jax.random.PRNGKey(0)
    N, C = 2, 4
    input_size, output_size = 16, 8                 # divisible -> stride path

    im = jax.random.uniform(key, (N, C, input_size, input_size),
                            dtype=jnp.float32, minval=-1.0, maxval=1.0)

    out = downsample(im, input_size, output_size)
    jax.block_until_ready(out)

    ref = downsample_ref(im, input_size, output_size)

    shape_ok = out.shape == (N, C, output_size, output_size)
    # bf16 operands with f32 accumulation -> ~1e-3-level deviations vs f32 reference.
    close_ok = bool(jnp.allclose(out.astype(jnp.float32), ref.astype(jnp.float32),
                                 atol=2e-2, rtol=2e-2))

    if shape_ok and close_ok:
        print("KERNEL_OK")
    else:
        print("KERNEL_MISMATCH", out.shape,
              float(jnp.max(jnp.abs(out.astype(jnp.float32) - ref.astype(jnp.float32)))))
</pallas_src>

<mosaic_0001>
module attributes {stable_mosaic.version = 11 : i64} {
  func.func @_blur_downsample_kernel(%arg0: i32, %arg1: memref<8x16xbf16, #tpu.memory_space<vmem>>, %arg2: memref<16x8xbf16, #tpu.memory_space<vmem>>, %arg3: memref<64x16xbf16, #tpu.memory_space<vmem>>, %arg4: memref<4x8x8xf32, #tpu.memory_space<vmem>>) attributes {dimension_semantics = [#tpu.dimension_semantics<parallel>], iteration_bounds = array<i64: 2>, scalar_prefetch = 0 : i64, scratch_operands = 0 : i64, tpu.core_type = #tpu.core_type<tc>, window_params = [{pipeline_mode = #tpu.pipeline_mode<synchronous>, transform_indices = @transform_0, window_bounds = array<i64: 8, 16>}, {pipeline_mode = #tpu.pipeline_mode<synchronous>, transform_indices = @transform_1, window_bounds = array<i64: 16, 8>}, {transform_indices = @transform_2, window_bounds = array<i64: 64, 16>}, {transform_indices = @transform_3, window_bounds = array<i64: 4, 8, 8>}]} {
    %c0 = arith.constant 0 : index
    %c0_0 = arith.constant 0 : index
    %0 = vector.load %arg1[%c0, %c0_0] : memref<8x16xbf16, #tpu.memory_space<vmem>>, vector<8x16xbf16>
    %c0_1 = arith.constant 0 : index
    %c0_2 = arith.constant 0 : index
    %1 = vector.load %arg2[%c0_1, %c0_2] : memref<16x8xbf16, #tpu.memory_space<vmem>>, vector<16x8xbf16>
    %c0_3 = arith.constant 0 : index
    %c0_4 = arith.constant 0 : index
    %2 = vector.load %arg3[%c0_3, %c0_4] : memref<64x16xbf16, #tpu.memory_space<vmem>>, vector<64x16xbf16>
    %cst = arith.constant dense<0.000000e+00> : vector<64x8xf32>
    %3 = tpu.matmul %2, %1, %cst {dimension_numbers = #tpu.dot_dimension_numbers<[1], [0], [0], [1], [0, 0, 1, 1], [], []>} : vector<64x16xbf16>, vector<16x8xbf16>, vector<64x8xf32> -> vector<64x8xf32>
    %4 = arith.truncf %3 : vector<64x8xf32> to vector<64x8xbf16>
    %5 = vector.extract_strided_slice %4 {offsets = [0, 0], sizes = [16, 8], strides = [1, 1]} : vector<64x8xbf16> to vector<16x8xbf16>
    %cst_5 = arith.constant dense<0.000000e+00> : vector<8x8xf32>
    %6 = tpu.matmul %0, %5, %cst_5 {dimension_numbers = #tpu.dot_dimension_numbers<[1], [0], [0], [1], [0, 0, 1, 1], [], []>} : vector<8x16xbf16>, vector<16x8xbf16>, vector<8x8xf32> -> vector<8x8xf32>
    %c0_6 = arith.constant 0 : index
    %c0_7 = arith.constant 0 : index
    %c0_8 = arith.constant 0 : index
    %7 = vector.load %arg4[%c0_6, %c0_7, %c0_8] : memref<4x8x8xf32, #tpu.memory_space<vmem>>, vector<1x8x8xf32>
    %8 = vector.shape_cast %7 : vector<1x8x8xf32> to vector<8x8xf32>
    %9 = vector.shape_cast %6 : vector<8x8xf32> to vector<1x8x8xf32>
    tpu.vector_store %arg4[%c0_6, %c0_7, %c0_8], %9 {strides = array<i32>} : memref<4x8x8xf32, #tpu.memory_space<vmem>>, vector<1x8x8xf32>,
    %10 = vector.extract_strided_slice %4 {offsets = [16, 0], sizes = [16, 8], strides = [1, 1]} : vector<64x8xbf16> to vector<16x8xbf16>
    %cst_9 = arith.constant dense<0.000000e+00> : vector<8x8xf32>
    %11 = tpu.matmul %0, %10, %cst_9 {dimension_numbers = #tpu.dot_dimension_numbers<[1], [0], [0], [1], [0, 0, 1, 1], [], []>} : vector<8x16xbf16>, vector<16x8xbf16>, vector<8x8xf32> -> vector<8x8xf32>
    %c1 = arith.constant 1 : index
    %c0_10 = arith.constant 0 : index
    %c0_11 = arith.constant 0 : index
    %12 = vector.load %arg4[%c1, %c0_10, %c0_11] : memref<4x8x8xf32, #tpu.memory_space<vmem>>, vector<1x8x8xf32>
    %13 = vector.shape_cast %12 : vector<1x8x8xf32> to vector<8x8xf32>
    %14 = vector.shape_cast %11 : vector<8x8xf32> to vector<1x8x8xf32>
    tpu.vector_store %arg4[%c1, %c0_10, %c0_11], %14 {strides = array<i32>} : memref<4x8x8xf32, #tpu.memory_space<vmem>>, vector<1x8x8xf32>,
    %15 = vector.extract_strided_slice %4 {offsets = [32, 0], sizes = [16, 8], strides = [1, 1]} : vector<64x8xbf16> to vector<16x8xbf16>
    %cst_12 = arith.constant dense<0.000000e+00> : vector<8x8xf32>
    %16 = tpu.matmul %0, %15, %cst_12 {dimension_numbers = #tpu.dot_dimension_numbers<[1], [0], [0], [1], [0, 0, 1, 1], [], []>} : vector<8x16xbf16>, vector<16x8xbf16>, vector<8x8xf32> -> vector<8x8xf32>
    %c2 = arith.constant 2 : index
    %c0_13 = arith.constant 0 : index
    %c0_14 = arith.constant 0 : index
    %17 = vector.load %arg4[%c2, %c0_13, %c0_14] : memref<4x8x8xf32, #tpu.memory_space<vmem>>, vector<1x8x8xf32>
    %18 = vector.shape_cast %17 : vector<1x8x8xf32> to vector<8x8xf32>
    %19 = vector.shape_cast %16 : vector<8x8xf32> to vector<1x8x8xf32>
    tpu.vector_store %arg4[%c2, %c0_13, %c0_14], %19 {strides = array<i32>} : memref<4x8x8xf32, #tpu.memory_space<vmem>>, vector<1x8x8xf32>,
    %20 = vector.extract_strided_slice %4 {offsets = [48, 0], sizes = [16, 8], strides = [1, 1]} : vector<64x8xbf16> to vector<16x8xbf16>
    %cst_15 = arith.constant dense<0.000000e+00> : vector<8x8xf32>
    %21 = tpu.matmul %0, %20, %cst_15 {dimension_numbers = #tpu.dot_dimension_numbers<[1], [0], [0], [1], [0, 0, 1, 1], [], []>} : vector<8x16xbf16>, vector<16x8xbf16>, vector<8x8xf32> -> vector<8x8xf32>
    %c3 = arith.constant 3 : index
    %c0_16 = arith.constant 0 : index
    %c0_17 = arith.constant 0 : index
    %22 = vector.load %arg4[%c3, %c0_16, %c0_17] : memref<4x8x8xf32, #tpu.memory_space<vmem>>, vector<1x8x8xf32>
    %23 = vector.shape_cast %22 : vector<1x8x8xf32> to vector<8x8xf32>
    %24 = vector.shape_cast %21 : vector<8x8xf32> to vector<1x8x8xf32>
    tpu.vector_store %arg4[%c3, %c0_16, %c0_17], %24 {strides = array<i32>} : memref<4x8x8xf32, #tpu.memory_space<vmem>>, vector<1x8x8xf32>,
    return
  }
  func.func @transform_0(%arg0: i32) -> (i32, i32) {
    %c0_i32 = arith.constant 0 : i32
    %c0_i32_0 = arith.constant 0 : i32
    %c0_i32_1 = arith.constant 0 : i32
    return %c0_i32, %c0_i32_0 : i32, i32
  }
  func.func @transform_1(%arg0: i32) -> (i32, i32) {
    %c0_i32 = arith.constant 0 : i32
    %c0_i32_0 = arith.constant 0 : i32
    %c0_i32_1 = arith.constant 0 : i32
    return %c0_i32, %c0_i32_0 : i32, i32
  }
  func.func @transform_2(%arg0: i32) -> (i32, i32) {
    %c0_i32 = arith.constant 0 : i32
    %c0_i32_0 = arith.constant 0 : i32
    return %arg0, %c0_i32 : i32, i32
  }
  func.func @transform_3(%arg0: i32) -> (i32, i32, i32) {
    %c0_i32 = arith.constant 0 : i32
    %c0_i32_0 = arith.constant 0 : i32
    %c0_i32_1 = arith.constant 0 : i32
    return %arg0, %c0_i32, %c0_i32_0 : i32, i32, i32
  }
}

</mosaic_0001>

<llo_original>
// kernel: tpu_custom_call.1
$region0: #{tpu_custom_call.1}
  #allocation0 [shape = 'u32[]', space=smem, size = 0x4, offset = 0x4, fixed_abs, tag = 'smem constant byte address 0x4 - core index']
  #allocation1 [shape = 'u32[144,128]{1,0:T(1,128)}', space=vmem, size = 0x12000, scoped, tag = 'internal scratch']
  %s0 = inlined_call_operand.vmem [shape: bf16[8,16], index: 0, kind: input, shape index: {}]
  %s1 = inlined_call_operand.vmem [shape: bf16[16,8], index: 1, kind: input, shape index: {}]
  %s2 = inlined_call_operand.vmem [shape: bf16[128,16], index: 2, kind: input, shape index: {}]
  %s3 = inlined_call_operand.hbm [shape: f32[8,8,8], index: 3, kind: output, shape index: {}]
  %s4 = sld [smem:[#allocation0]]
  $region45: #{tpu_custom_call.1} parent=0
    _
  %s6 = ssub.s32 1, %s4
  %s7 = scalar_select 0, %s6, %s4
  $region1: #{tpu_custom_call.1} parent=0
    #allocation2 [shape = 'u8[32768]{0}', space=vmem, size = 0x8000, scoped, tag = 'output window, operand 0']
    #allocation3 [shape = 's32[2]{0}', space=sflag, size = 0x8, scoped, tag = 'scoped memory for tpu_custom_call.1']
    %8 = vsyncpa [#allocation3], 0
    %s9 = scalar_lea.sflag [#allocation3], 1
    %10 = vsyncpa %s9, 0
    loop: start=0, step=1, limit=4
    $region2: #{tpu_custom_call.1} parent=1 // loop_pre_header
      _
    $region3: #{tpu_custom_call.1} parent=1 // loop_header
      %s12 = sphi 0, %s16
      %p13 = scmp.ge.s32.totalorder %s12, 4
      %s20 = sphi 0, %s20
      %s22 = sphi 0, %s20
      %s23 = sphi 0, %s22
      %s37 = sphi 0, %s23
      %s41 = sphi 0, %s41
      %s43 = sphi 0, %s41
      %s44 = sphi 0, %s43
      %s58 = sphi 0, %s44
      %s64 = sphi 0, %s66
      %s67 = sphi 0, %s64
      %s68 = sphi 0, %s67
      %s84 = sphi 0, %s68
      %s90 = sphi 0, %s92
      %s93 = sphi 0, %s90
      %s94 = sphi 0, %s93
      %s110 = sphi 0, %s94
    $region4: #{tpu_custom_call.1} parent=1 // loop_header_branch
      %15 = sbr.rel (%p13) target = $region8
    $region5: #{tpu_custom_call.1} parent=1 // loop_body
      %s17 = ssub.s32 %s12, 1
      %s18 = ssub.s32 %s12, 2
      %s19 = sadd.s32 %s12, 1
      %s21 = sadd.s32 %s20, 1
      %p24 = scmp.eq.s32.totalorder %s12, 1
      %p25 = scmp.ne.s32.totalorder %s20, %s22
      %p26 = scmp.eq.s32.totalorder %s12, 0
      %p27 = por %p25, %p26
      %p28 = scmp.ne.s32.totalorder %s20, %s22
      %p29 = scmp.eq.s32.totalorder %s17, 1
      %p30 = por %p28, %p29
      %p31 = scmp.ne.s32.totalorder %s22, %s23
      %p32 = scmp.eq.s32.totalorder %s17, 0
      %p33 = por %p31, %p32
      %p34 = scmp.ne.s32.totalorder %s22, %s23
      %p35 = scmp.eq.s32.totalorder %s18, 1
      %p36 = por %p34, %p35
      %p38 = scmp.ne.s32.totalorder %s23, %s37
      %p39 = scmp.eq.s32.totalorder %s18, 0
      %p40 = por %p38, %p39
      %s42 = sadd.s32 %s41, 1
      %p45 = scmp.eq.s32.totalorder %s12, 1
      %p46 = scmp.ne.s32.totalorder %s41, %s43
      %p47 = scmp.eq.s32.totalorder %s12, 0
      %p48 = por %p46, %p47
      %p49 = scmp.ne.s32.totalorder %s41, %s43
      %p50 = scmp.eq.s32.totalorder %s17, 1
      %p51 = por %p49, %p50
      %p52 = scmp.ne.s32.totalorder %s43, %s44
      %p53 = scmp.eq.s32.totalorder %s17, 0
      %p54 = por %p52, %p53
      %p55 = scmp.ne.s32.totalorder %s43, %s44
      %p56 = scmp.eq.s32.totalorder %s18, 1
      %p57 = por %p55, %p56
      %p59 = scmp.ne.s32.totalorder %s44, %s58
      %p60 = scmp.eq.s32.totalorder %s18, 0
      %p61 = por %p59, %p60
      %s62 = ssub.s32 %s12, %s19
      %p63 = scmp.eq.s32.totalorder %s62, 0
      %s65 = sadd.s32 %s64, 1
      %s66 = scalar_select %p63, %s64, %s65
      %p69 = pneg %p63
      %p70 = scmp.eq.s32.totalorder %s12, 1
      %p71 = por %p69, %p70
      %p72 = scmp.ne.s32.totalorder %s64, %s67
      %p73 = scmp.eq.s32.totalorder %s12, 0
      %p74 = por %p72, %p73
      %p75 = scmp.ne.s32.totalorder %s64, %s67
      %p76 = scmp.eq.s32.totalorder %s17, 1
      %p77 = por %p75, %p76
      %p78 = scmp.ne.s32.totalorder %s67, %s68
      %p79 = scmp.eq.s32.totalorder %s17, 0
      %p80 = por %p78, %p79
      %p81 = scmp.ne.s32.totalorder %s67, %s68
      %p82 = scmp.eq.s32.totalorder %s18, 1
      %p83 = por %p81, %p82
      %p85 = scmp.ne.s32.totalorder %s68, %s84
      %p86 = scmp.eq.s32.totalorder %s18, 0
      %p87 = por %p85, %p86
      %s88 = ssub.s32 %s12, %s19
      %p89 = scmp.eq.s32.totalorder %s88, 0
      %s91 = sadd.s32 %s90, 1
      %s92 = scalar_select %p89, %s90, %s91
      %p95 = pneg %p89
      %p96 = scmp.eq.s32.totalorder %s12, 1
      %p97 = por %p95, %p96
      %p98 = scmp.ne.s32.totalorder %s90, %s93
      %p99 = scmp.eq.s32.totalorder %s12, 0
      %p100 = por %p98, %p99
      %p101 = scmp.ne.s32.totalorder %s90, %s93
      %p102 = scmp.eq.s32.totalorder %s17, 1
      %p103 = por %p101, %p102
      %p104 = scmp.ne.s32.totalorder %s93, %s94
      %p105 = scmp.eq.s32.totalorder %s17, 0
      %p106 = por %p104, %p105
      %p107 = scmp.ne.s32.totalorder %s93, %s94
      %p108 = scmp.eq.s32.totalorder %s18, 1
      %p109 = por %p107, %p108
      %p111 = scmp.ne.s32.totalorder %s94, %s110
      %p112 = scmp.eq.s32.totalorder %s18, 0
      %p113 = por %p111, %p112
      %p114 = scmp.le.s32.totalorder 1, %s12
      %p115 = scmp.lt.s32.totalorder %s12, 3
      %p116 = pnand %p114, %p115
      %p117 = pneg %p116
      // Predicated region
      $region9: #{tpu_custom_call.1} parent=5 // pred_check
        _
      $region10: #{tpu_custom_call.1} parent=5 // pred_check_branch
        %119 = sbr.rel (%p116) target = $region12
      $region11: #{tpu_custom_call.1} parent=5 // pred_region
        %s120 = ssub.s32 %s12, 1
        // Predicated region
        $region13: #{tpu_custom_call.1} parent=11 // pred_check
          %p121 = pneg %p33
        $region14: #{tpu_custom_call.1} parent=11 // pred_check_branch
          %123 = sbr.rel (%p121) target = $region16
        $region15: #{tpu_custom_call.1} parent=11 // pred_region
          _
        $region16: #{tpu_custom_call.1} parent=11 // pred_fallthru
          _
        // Predicated region
        $region17: #{tpu_custom_call.1} parent=11 // pred_check
          %p124 = pneg %p54
        $region18: #{tpu_custom_call.1} parent=11 // pred_check_branch
          %126 = sbr.rel (%p124) target = $region20
        $region19: #{tpu_custom_call.1} parent=11 // pred_region
          _
        $region20: #{tpu_custom_call.1} parent=11 // pred_fallthru
          _
      $region12: #{tpu_custom_call.1} parent=5 // pred_fallthru
        _
      %p127 = scmp.lt.s32.totalorder %s12, 2
      // Predicated region
      $region21: #{tpu_custom_call.1} parent=5 // pred_check
        %p128 = pneg %p127
      $region22: #{tpu_custom_call.1} parent=5 // pred_check_branch
        %130 = sbr.rel (%p128) target = $region24
      $region23: #{tpu_custom_call.1} parent=5 // pred_region
        // Predicated region
        $region25: #{tpu_custom_call.1} parent=23 // pred_check
          %p131 = pneg %p74
        $region26: #{tpu_custom_call.1} parent=23 // pred_check_branch
          %133 = sbr.rel (%p131) target = $region28
        $region27: #{tpu_custom_call.1} parent=23 // pred_region
          %s134 = smul.u32 8, %s12
          %p135 = scmp.lt.s32.totalorder %s134, 15
          %s136 = scalar_select %p135, %s134, 15
          %s137 = smul.addr %s136, 4
          %s138 = scalar_lea.vmem %s2, %s137
          %s139 = smul.u32 8, %s12
        $region28: #{tpu_custom_call.1} parent=23 // pred_fallthru
          _
      $region24: #{tpu_custom_call.1} parent=5 // pred_fallthru
        _
      %p140 = scmp.le.s32.totalorder 1, %s12
      %p141 = scmp.lt.s32.totalorder %s12, 3
      %p142 = pnand %p140, %p141
      %p143 = pneg %p142
      // Predicated region
      $region29: #{tpu_custom_call.1} parent=5 // pred_check
        _
      $region30: #{tpu_custom_call.1} parent=5 // pred_check_branch
        %145 = sbr.rel (%p142) target = $region32
      $region31: #{tpu_custom_call.1} parent=5 // pred_region
        %s146 = ssub.s32 %s12, 1
        %p147 = pneg %p33
        %p148 = pneg %p30
        %p149 = pneg %p54
        %p150 = pneg %p51
        %s151 = smul.u32 8, %s17
        %p152 = scmp.lt.s32.totalorder %s151, 15
        %s153 = scalar_select %p152, %s151, 15
        %s154 = smul.addr %s153, 4
        %s155 = scalar_lea.vmem %s2, %s154
        %p156 = pneg %p80
        %p157 = pneg %p77
        %p158 = pneg %p106
        %p159 = pneg %p103
        %s160 = sand.u32 %s93, 1
        %s161 = scalar_lea.sflag [#allocation3], %s160
        %s162 = sand.u32 %s93, 1
        %s163 = smul.addr %s162, 32
        %s164 = scalar_lea.vmem [#allocation2], %s163
        %s165 = smul.u32 8, %s17
        %p166 = scmp.lt.s32.totalorder %s165, 15
        %s167 = scalar_select %p166, %s165, 15
        %s168 = smul.addr %s167, 4
        %s169 = scalar_lea.vmem %s2, %s168
        %s170 = smul.u32 8, %s17
        %s171 = smul.u32 4, %s17
        %v173 = vld [vmem:[%s0] sm:$0xf]
        %v174 = vld [vmem:[%s1] sm:$0xf]
        %v175 = vld [vmem:[%s1 + $0x4] sm:$0xf]
        %v176 = vld [vmem:[%s169] sm:$0xf]
        %v177 = vld [vmem:[%s169 + $0x4] sm:$0xf]
        %v178 = vld [vmem:[%s169 + $0x8] sm:$0xf]
        %v179 = vld [vmem:[%s169 + $0xc] sm:$0xf]
        %v180 = vld [vmem:[%s169 + $0x10] sm:$0xf]
        %v181 = vld [vmem:[%s169 + $0x14] sm:$0xf]
        %v182 = vld [vmem:[%s169 + $0x18] sm:$0xf]
        %v183 = vld [vmem:[%s169 + $0x1c] sm:$0xf]
        %v192 = vunpack.c.l.b16 %v176
        %v193 = vunpack.c.l.b16 %v177
        %v194 = vunpack.c.l.b16 %v178
        %v195 = vunpack.c.l.b16 %v179
        %v196 = vunpack.c.l.b16 %v180
        %v197 = vunpack.c.l.b16 %v181
        %v198 = vunpack.c.l.b16 %v182
        %v199 = vunpack.c.l.b16 %v183
        %v200 = vpack.c.b16 %v193, %v192
        %v201 = vpack.c.b16 %v195, %v194
        %v202 = vpack.c.b16 %v197, %v196
        %v203 = vpack.c.b16 %v199, %v198
        %v206 = vunpack.c.l.b16 %v174
        %v207 = vunpack.c.l.b16 %v175
        %v208 = vpack.c.b16 %v207, %v206
        %vm210 = vcmask 130048
        %v212 = vsel %vm210, %v200, 0
        %v215 = vsel %vm210, %v201, 0
        %v218 = vsel %vm210, %v202, 0
        %v221 = vsel %vm210, %v203, 0
        %223 = vmatprep.subr.bf16.mxu0 0
        %224 = vmatpush1.bf16.msra.mxu0 %v208
        %225 = vmatprep.subr.bf16.mxu0 0
        %226 = vmatpush1.bf16.msra.mxu0 0
        %227 = vmatprep.subr.bf16.mxu0 0
        %228 = vmatpush1.bf16.msra.mxu0 0
        %229 = vmatprep.subr.bf16.mxu0 0
        %230 = vmatpush1.bf16.msra.mxu0 0
        %231 = vmatprep.subr.bf16.mxu0 0
        %232 = vmatpush1.bf16.msra.mxu0 0
        %233 = vmatprep.subr.bf16.mxu0 0
        %234 = vmatpush1.bf16.msra.mxu0 0
        %235 = vmatprep.subr.bf16.mxu0 0
        %236 = vmatpush1.bf16.msra.mxu0 0
        %237 = vmatprep.subr.bf16.mxu0 0
        %238 = vmatpush1.bf16.msra.mxu0 0
        %239 = vmatprep.subr.bf16.mxu0 0
        %240 = vmatpush1.bf16.msra.mxu0 0
        %241 = vmatprep.subr.bf16.mxu0 0
        %242 = vmatpush1.bf16.msra.mxu0 0
        %243 = vmatprep.subr.bf16.mxu0 0
        %244 = vmatpush1.bf16.msra.mxu0 0
        %245 = vmatprep.subr.bf16.mxu0 0
        %246 = vmatpush1.bf16.msra.mxu0 0
        %247 = vmatprep.subr.bf16.mxu0 0
        %248 = vmatpush1.bf16.msra.mxu0 0
        %249 = vmatprep.subr.bf16.mxu0 0
        %250 = vmatpush1.bf16.msra.mxu0 0
        %251 = vmatprep.subr.bf16.mxu0 0
        %252 = vmatpush1.bf16.msra.mxu0 0
        %253 = vmatprep.subr.bf16.mxu0 0
        %254 = vmatpush1.bf16.msra.mxu0 0
        %255 = vmatprep.mubr.bf16.mxu0 0
        %256 = vmatmul.mubr.bf16.gmra.mrb[0].mxu0 %v212
        %v257 = vpop.f32.mrb[0].mxu0
        %v258 = vadd.f32 0.0, %v257
        %v259 = vpop.f32.mrb[0].mxu0
        %v260 = vpop.f32.mrb[0].mxu0
        %v261 = vadd.f32 0.0, %v260
        %v262 = vpop.f32.mrb[0].mxu0
        %263 = vmatprep.mubr.bf16.mxu0 0
        %264 = vmatmul.mubr.bf16.gmra.mrb[0].mxu0 %v215
        %v265 = vpop.f32.mrb[0].mxu0
        %v266 = vadd.f32 0.0, %v265
        %v267 = vpop.f32.mrb[0].mxu0
        %v268 = vpop.f32.mrb[0].mxu0
        %v269 = vadd.f32 0.0, %v268
        %v270 = vpop.f32.mrb[0].mxu0
        %271 = vmatprep.mubr.bf16.mxu0 0
        %272 = vmatmul.mubr.bf16.gmra.mrb[0].mxu0 %v218
        %v273 = vpop.f32.mrb[0].mxu0
        %v274 = vadd.f32 0.0, %v273
        %v275 = vpop.f32.mrb[0].mxu0
        %v276 = vpop.f32.mrb[0].mxu0
        %v277 = vadd.f32 0.0, %v276
        %v278 = vpop.f32.mrb[0].mxu0
        %279 = vmatprep.mubr.bf16.mxu0 0
        %280 = vmatmul.mubr.bf16.gmra.mrb[0].mxu0 %v221
        %v281 = vpop.f32.mrb[0].mxu0
        %v282 = vadd.f32 0.0, %v281
        %v283 = vpop.f32.mrb[0].mxu0
        %v284 = vpop.f32.mrb[0].mxu0
        %v285 = vadd.f32 0.0, %v284
        %v286 = vpop.f32.mrb[0].mxu0
        %287 = vdwg.mxu0
        %v288 = vpack.c.bf16 %v261, %v258
        %v289 = vpack.c.bf16 %v269, %v266
        %v290 = vpack.c.bf16 %v277, %v274
        %v291 = vpack.c.bf16 %v285, %v282
        %v293 = vsel %vm210, %v173, 0
        %295 = vmatprep.subr.bf16.mxu0 0
        %296 = vmatpush1.bf16.msra.mxu0 %v288
        %297 = vmatprep.subr.bf16.mxu0 0
        %298 = vmatpush1.bf16.msra.mxu0 0
        %299 = vmatprep.subr.bf16.mxu0 0
        %300 = vmatpush1.bf16.msra.mxu0 0
        %301 = vmatprep.subr.bf16.mxu0 0
        %302 = vmatpush1.bf16.msra.mxu0 0
        %303 = vmatprep.subr.bf16.mxu0 0
        %304 = vmatpush1.bf16.msra.mxu0 0
        %305 = vmatprep.subr.bf16.mxu0 0
        %306 = vmatpush1.bf16.msra.mxu0 0
        %307 = vmatprep.subr.bf16.mxu0 0
        %308 = vmatpush1.bf16.msra.mxu0 0
        %309 = vmatprep.subr.bf16.mxu0 0
        %310 = vmatpush1.bf16.msra.mxu0 0
        %311 = vmatprep.subr.bf16.mxu0 0
        %312 = vmatpush1.bf16.msra.mxu0 0
        %313 = vmatprep.subr.bf16.mxu0 0
        %314 = vmatpush1.bf16.msra.mxu0 0
        %315 = vmatprep.subr.bf16.mxu0 0
        %316 = vmatpush1.bf16.msra.mxu0 0
        %317 = vmatprep.subr.bf16.mxu0 0
        %318 = vmatpush1.bf16.msra.mxu0 0
        %319 = vmatprep.subr.bf16.mxu0 0
        %320 = vmatpush1.bf16.msra.mxu0 0
        %321 = vmatprep.subr.bf16.mxu0 0
        %322 = vmatpush1.bf16.msra.mxu0 0
        %323 = vmatprep.subr.bf16.mxu0 0
        %324 = vmatpush1.bf16.msra.mxu0 0
        %325 = vmatprep.subr.bf16.mxu0 0
        %326 = vmatpush1.bf16.msra.mxu0 0
        %327 = vmatprep.mubr.bf16.mxu0 0
        %328 = vmatmul.mubr.bf16.gmra.mrb[0].mxu0 %v293
        %v329 = vpop.f32.mrb[0].mxu0
        %v330 = vadd.f32 0.0, %v329
        %v331 = vpop.f32.mrb[0].mxu0
        %v332 = vpop.f32.mrb[0].mxu0
        %v333 = vpop.f32.mrb[0].mxu0
        %334 = vdwg.mxu0
        %vm335 = vcmask 64512
        %336 = vst.msk [vmem:[%s164] sm:$0xff] %vm335, %v330
        %337 = vmatprep.subr.bf16.mxu0 0
        %338 = vmatpush1.bf16.msra.mxu0 %v289
        %339 = vmatprep.subr.bf16.mxu0 0
        %340 = vmatpush1.bf16.msra.mxu0 0
        %341 = vmatprep.subr.bf16.mxu0 0
        %342 = vmatpush1.bf16.msra.mxu0 0
        %343 = vmatprep.subr.bf16.mxu0 0
        %344 = vmatpush1.bf16.msra.mxu0 0
        %345 = vmatprep.subr.bf16.mxu0 0
        %346 = vmatpush1.bf16.msra.mxu0 0
        %347 = vmatprep.subr.bf16.mxu0 0
        %348 = vmatpush1.bf16.msra.mxu0 0
        %349 = vmatprep.subr.bf16.mxu0 0
        %350 = vmatpush1.bf16.msra.mxu0 0
        %351 = vmatprep.subr.bf16.mxu0 0
        %352 = vmatpush1.bf16.msra.mxu0 0
        %353 = vmatprep.subr.bf16.mxu0 0
        %354 = vmatpush1.bf16.msra.mxu0 0
        %355 = vmatprep.subr.bf16.mxu0 0
        %356 = vmatpush1.bf16.msra.mxu0 0
        %357 = vmatprep.subr.bf16.mxu0 0
        %358 = vmatpush1.bf16.msra.mxu0 0
        %359 = vmatprep.subr.bf16.mxu0 0
        %360 = vmatpush1.bf16.msra.mxu0 0
        %361 = vmatprep.subr.bf16.mxu0 0
        %362 = vmatpush1.bf16.msra.mxu0 0
        %363 = vmatprep.subr.bf16.mxu0 0
        %364 = vmatpush1.bf16.msra.mxu0 0
        %365 = vmatprep.subr.bf16.mxu0 0
        %366 = vmatpush1.bf16.msra.mxu0 0
        %367 = vmatprep.subr.bf16.mxu0 0
        %368 = vmatpush1.bf16.msra.mxu0 0
        %369 = vmatprep.mubr.bf16.mxu0 0
        %370 = vmatmul.mubr.bf16.gmra.mrb[0].mxu0 %v293
        %v371 = vpop.f32.mrb[0].mxu0
        %v372 = vadd.f32 0.0, %v371
        %v373 = vpop.f32.mrb[0].mxu0
        %v374 = vpop.f32.mrb[0].mxu0
        %v375 = vpop.f32.mrb[0].mxu0
        %376 = vdwg.mxu0
        %s377 = scalar_lea.vmem %s164, 8 [#allocation2]
        %378 = vst.msk [vmem:[%s377] sm:$0xff] %vm335, %v372
        %379 = vmatprep.subr.bf16.mxu0 0
        %380 = vmatpush1.bf16.msra.mxu0 %v290
        %381 = vmatprep.subr.bf16.mxu0 0
        %382 = vmatpush1.bf16.msra.mxu0 0
        %383 = vmatprep.subr.bf16.mxu0 0
        %384 = vmatpush1.bf16.msra.mxu0 0
        %385 = vmatprep.subr.bf16.mxu0 0
        %386 = vmatpush1.bf16.msra.mxu0 0
        %387 = vmatprep.subr.bf16.mxu0 0
        %388 = vmatpush1.bf16.msra.mxu0 0
        %389 = vmatprep.subr.bf16.mxu0 0
        %390 = vmatpush1.bf16.msra.mxu0 0
        %391 = vmatprep.subr.bf16.mxu0 0
        %392 = vmatpush1.bf16.msra.mxu0 0
        %393 = vmatprep.subr.bf16.mxu0 0
        %394 = vmatpush1.bf16.msra.mxu0 0
        %395 = vmatprep.subr.bf16.mxu0 0
        %396 = vmatpush1.bf16.msra.mxu0 0
        %397 = vmatprep.subr.bf16.mxu0 0
        %398 = vmatpush1.bf16.msra.mxu0 0
        %399 = vmatprep.subr.bf16.mxu0 0
        %400 = vmatpush1.bf16.msra.mxu0 0
        %401 = vmatprep.subr.bf16.mxu0 0
        %402 = vmatpush1.bf16.msra.mxu0 0
        %403 = vmatprep.subr.bf16.mxu0 0
        %404 = vmatpush1.bf16.msra.mxu0 0
        %405 = vmatprep.subr.bf16.mxu0 0
        %406 = vmatpush1.bf16.msra.mxu0 0
        %407 = vmatprep.subr.bf16.mxu0 0
        %408 = vmatpush1.bf16.msra.mxu0 0
        %409 = vmatprep.subr.bf16.mxu0 0
        %410 = vmatpush1.bf16.msra.mxu0 0
        %411 = vmatprep.mubr.bf16.mxu0 0
        %412 = vmatmul.mubr.bf16.gmra.mrb[0].mxu0 %v293
        %v413 = vpop.f32.mrb[0].mxu0
        %v414 = vadd.f32 0.0, %v413
        %v415 = vpop.f32.mrb[0].mxu0
        %v416 = vpop.f32.mrb[0].mxu0
        %v417 = vpop.f32.mrb[0].mxu0
        %418 = vdwg.mxu0
        %s419 = scalar_lea.vmem %s164, 16 [#allocation2]
        %420 = vst.msk [vmem:[%s419] sm:$0xff] %vm335, %v414
        %421 = vmatprep.subr.bf16.mxu0 0
        %422 = vmatpush1.bf16.msra.mxu0 %v291
        %423 = vmatprep.subr.bf16.mxu0 0
        %424 = vmatpush1.bf16.msra.mxu0 0
        %425 = vmatprep.subr.bf16.mxu0 0
        %426 = vmatpush1.bf16.msra.mxu0 0
        %427 = vmatprep.subr.bf16.mxu0 0
        %428 = vmatpush1.bf16.msra.mxu0 0
        %429 = vmatprep.subr.bf16.mxu0 0
        %430 = vmatpush1.bf16.msra.mxu0 0
        %431 = vmatprep.subr.bf16.mxu0 0
        %432 = vmatpush1.bf16.msra.mxu0 0
        %433 = vmatprep.subr.bf16.mxu0 0
        %434 = vmatpush1.bf16.msra.mxu0 0
        %435 = vmatprep.subr.bf16.mxu0 0
        %436 = vmatpush1.bf16.msra.mxu0 0
        %437 = vmatprep.subr.bf16.mxu0 0
        %438 = vmatpush1.bf16.msra.mxu0 0
        %439 = vmatprep.subr.bf16.mxu0 0
        %440 = vmatpush1.bf16.msra.mxu0 0
        %441 = vmatprep.subr.bf16.mxu0 0
        %442 = vmatpush1.bf16.msra.mxu0 0
        %443 = vmatprep.subr.bf16.mxu0 0
        %444 = vmatpush1.bf16.msra.mxu0 0
        %445 = vmatprep.subr.bf16.mxu0 0
        %446 = vmatpush1.bf16.msra.mxu0 0
        %447 = vmatprep.subr.bf16.mxu0 0
        %448 = vmatpush1.bf16.msra.mxu0 0
        %449 = vmatprep.subr.bf16.mxu0 0
        %450 = vmatpush1.bf16.msra.mxu0 0
        %451 = vmatprep.subr.bf16.mxu0 0
        %452 = vmatpush1.bf16.msra.mxu0 0
        %453 = vmatprep.mubr.bf16.mxu0 0
        %454 = vmatmul.mubr.bf16.gmra.mrb[0].mxu0 %v293
        %v455 = vpop.f32.mrb[0].mxu0
        %v456 = vadd.f32 0.0, %v455
        %v457 = vpop.f32.mrb[0].mxu0
        %v458 = vpop.f32.mrb[0].mxu0
        %v459 = vpop.f32.mrb[0].mxu0
        %460 = vdwg.mxu0
        %s461 = scalar_lea.vmem %s164, 24 [#allocation2]
        %462 = vst.msk [vmem:[%s461] sm:$0xff] %vm335, %v456
        %s463 = sand.u32 %s93, 1
        %s464 = scalar_lea.sflag [#allocation3], %s463
        %s465 = sand.u32 %s93, 1
        %s466 = smul.addr %s465, 32
        %s467 = scalar_lea.vmem [#allocation2], %s466
        // Predicated region
        $region33: #{tpu_custom_call.1} parent=31 // pred_check
          %p468 = pneg %p103
        $region34: #{tpu_custom_call.1} parent=31 // pred_check_branch
          %470 = sbr.rel (%p468) target = $region36
        $region35: #{tpu_custom_call.1} parent=31 // pred_region
          %s471 = smul.u32 4, %s17
          %s473 = ssub.s32 512, 512
          %474 = vsyncadd %s464, %s473
          %s475 = smul.addr %s471, 128
          %s476 = scalar_lea.hbm %s3, %s475
          %s477 = sshll.u32 %s467, 4
          %s478 = int_to_ptr.vmem [resolvable:$true] %s477
          %483 = dma.vmem_to_hbm [thread:$0]  %s478, 512, %s476, %s464, 128, 128, 8
        $region36: #{tpu_custom_call.1} parent=31 // pred_fallthru
          _
      $region32: #{tpu_custom_call.1} parent=5 // pred_fallthru
        _
      %p484 = scmp.le.s32.totalorder 2, %s12
      // Predicated region
      $region37: #{tpu_custom_call.1} parent=5 // pred_check
        %p485 = pneg %p484
      $region38: #{tpu_custom_call.1} parent=5 // pred_check_branch
        %487 = sbr.rel (%p485) target = $region40
      $region39: #{tpu_custom_call.1} parent=5 // pred_region
        %s488 = ssub.s32 %s12, 2
        // Predicated region
        $region41: #{tpu_custom_call.1} parent=39 // pred_check
          %p489 = pneg %p109
        $region42: #{tpu_custom_call.1} parent=39 // pred_check_branch
          %491 = sbr.rel (%p489) target = $region44
        $region43: #{tpu_custom_call.1} parent=39 // pred_region
          %s492 = sand.u32 %s94, 1
          %s493 = scalar_lea.sflag [#allocation3], %s492
          %s494 = sand.u32 %s94, 1
          %s495 = smul.addr %s494, 32
          %s496 = scalar_lea.vmem [#allocation2], %s495
          %497 = dma.done %s493, 512
        $region44: #{tpu_custom_call.1} parent=39 // pred_fallthru
          _
      $region40: #{tpu_custom_call.1} parent=5 // pred_fallthru
        _
    $region6: #{tpu_custom_call.1} parent=1 // loop_footer
      %s16 = sadd.s32 1, %s12
    $region7: #{tpu_custom_call.1} parent=1 // loop_footer_branch
      %11 = sbr.rel target = $region3
    $region8: #{tpu_custom_call.1} parent=1 // loop_exit
      _
    %498 = vsyncpa [#allocation3], 1
    %s499 = scalar_lea.sflag [#allocation3], 1
    %500 = vsyncpa %s499, 1

</llo_original>
